<compile_context>
chip_gen: v5e
topology: v5e:2x2
jax: 0.10.0
libtpu: 0.0.40
codegen_flags: <defaults>
</compile_context>

<pallas_src>
import functools

import jax
import jax.numpy as jnp
from jax import lax
from jax.experimental import pallas as pl
from jax.experimental.pallas import tpu as pltpu


def _conv_rows_kernel(x_ref, w_ref, b_ref, o_ref, *, KH, KW, stride, Ho, Wo):
    """Direct convolution for one batch element.

    x_ref: (s*s, Hq, Wq, C)  phase-decomposed, zero-padded input (VMEM)
    w_ref: (KH*KW, C, Pp)    weights, planes padded to lane-dense Pp (VMEM)
    b_ref: (1, Pp)           bias (zeros when the layer has no bias)
    o_ref: (1, Ho, Wo, Pp)   output block for this batch element
    """
    s = stride
    Pp = w_ref.shape[-1]
    bias = b_ref[...]  # (1, Pp) — hoisted out of the row loop

    def row(ho, carry):
        acc = jnp.zeros((Wo, Pp), jnp.float32)
        # Static KH*KW tap loop: each tap is a stride-1 slice of the phase
        # tile followed by a (Wo, C) x (C, Pp) MXU matmul, f32 accumulate.
        for kh in range(KH):
            for kw in range(KW):
                ph, dh = kh % s, kh // s
                pw, dw = kw % s, kw // s
                patch = x_ref[ph * s + pw, dh + ho, pl.ds(dw, Wo), :]  # (Wo, C)
                acc = acc + jnp.dot(patch, w_ref[kh * KW + kw],
                                    preferred_element_type=jnp.float32)
        # Fused bias + store of a lane-dense (Wo, Pp) row.
        o_ref[0, ho] = (acc + bias).astype(o_ref.dtype)
        return carry

    lax.fori_loop(0, Ho, row, 0)


class Conv:
    """JAX/Pallas port of det3d.models.utils.conv.Conv (nn.Conv2d path)."""

    def __init__(self, inplanes, planes, kernel_size, stride, bias=False,
                 *, key=None, **kwargs):
        self.inplanes = inplanes
        self.planes = planes
        self.kernel_size = kernel_size
        self.stride = stride
        self.padding = kwargs.get("padding", kernel_size // 2)
        if key is None:
            key = jax.random.PRNGKey(42)
        wkey, bkey = jax.random.split(key)
        # Deterministic init matching PyTorch Conv2d default:
        # U(-1/sqrt(fan_in), 1/sqrt(fan_in)); weight layout OIHW.
        fan_in = inplanes * kernel_size * kernel_size
        bound = 1.0 / (fan_in ** 0.5)
        self.weight = jax.random.uniform(
            wkey, (planes, inplanes, kernel_size, kernel_size),
            minval=-bound, maxval=bound, dtype=jnp.float32)
        self.bias = (
            jax.random.uniform(bkey, (planes,), minval=-bound, maxval=bound,
                               dtype=jnp.float32)
            if bias else None)

    def __call__(self, x):
        # x: (N, C, H, W) float32, nn.Conv2d input convention.
        N, C, H, W = x.shape
        assert C == self.inplanes
        KH = KW = self.kernel_size
        s, p = self.stride, self.padding
        Ho = (H + 2 * p - KH) // s + 1
        Wo = (W + 2 * p - KW) // s + 1
        # Per-phase spatial extents needed by the kernel's window reads.
        Hq = Ho + (KH - 1) // s
        Wq = Wo + (KW - 1) // s
        # Lane-dense output planes; pad contraction (channel) dim to sublanes.
        Pp = -(-self.planes // 128) * 128
        Cp = -(-C // 8) * 8

        # ---- glue: NCHW -> NHWC, zero pad, stride-phase decomposition ----
        x_nhwc = jnp.transpose(x, (0, 2, 3, 1))
        pad_h = max(0, s * Hq - H - p)
        pad_w = max(0, s * Wq - W - p)
        x_pad = jnp.pad(
            x_nhwc, ((0, 0), (p, pad_h), (p, pad_w), (0, Cp - C)))
        x_pad = x_pad[:, :s * Hq, :s * Wq, :]
        # Phase (ph, pw) holds input rows ph::s and cols pw::s, so every
        # in-kernel tap read becomes a stride-1 static slice. Pure
        # repartition of the input (no amplification); no-op for stride=1.
        x_ph = (x_pad.reshape(N, Hq, s, Wq, s, Cp)
                     .transpose(0, 2, 4, 1, 3, 5)
                     .reshape(N * s * s, Hq, Wq, Cp))

        # OIHW weight -> (KH*KW, Cp, Pp); bias -> (1, Pp) (zeros if no bias).
        w = jnp.transpose(self.weight, (2, 3, 1, 0)).reshape(
            KH * KW, C, self.planes)
        w = jnp.pad(w, ((0, 0), (0, Cp - C), (0, Pp - self.planes)))
        b = (self.bias if self.bias is not None
             else jnp.zeros((self.planes,), jnp.float32))
        b = jnp.pad(b, (0, Pp - self.planes)).reshape(1, Pp)

        kernel = functools.partial(
            _conv_rows_kernel, KH=KH, KW=KW, stride=s, Ho=Ho, Wo=Wo)

        flops = 2 * N * Ho * Wo * KH * KW * Cp * Pp
        bytes_accessed = 4 * (x_ph.size + w.size + b.size + N * Ho * Wo * Pp)

        out = pl.pallas_call(
            kernel,
            out_shape=jax.ShapeDtypeStruct((N, Ho, Wo, Pp), jnp.float32),
            grid_spec=pltpu.PrefetchScalarGridSpec(
                num_scalar_prefetch=0,
                grid=(N,),
                in_specs=[
                    # One batch element's s*s phase tiles per grid step.
                    pl.BlockSpec((s * s, Hq, Wq, Cp),
                                 lambda n: (n, 0, 0, 0)),
                    # Weights / bias: constant index_map -> stay VMEM-resident.
                    pl.BlockSpec((KH * KW, Cp, Pp), lambda n: (0, 0, 0)),
                    pl.BlockSpec((1, Pp), lambda n: (0, 0)),
                ],
                out_specs=pl.BlockSpec((1, Ho, Wo, Pp),
                                       lambda n: (n, 0, 0, 0)),
            ),
            compiler_params=pltpu.CompilerParams(
                dimension_semantics=("parallel",),
            ),
            cost_estimate=pl.CostEstimate(
                flops=flops, transcendentals=0,
                bytes_accessed=bytes_accessed),
        )(x_ph, w, b)

        out = out[..., :self.planes]                 # drop lane padding
        return jnp.transpose(out, (0, 3, 1, 2))      # NHWC -> NCHW


def _reference_conv(x, weight, stride, padding, bias=None):
    out = jax.lax.conv_general_dilated(
        x, weight,
        window_strides=(stride, stride),
        padding=((padding, padding), (padding, padding)),
        dimension_numbers=("NCHW", "OIHW", "NCHW"))
    if bias is not None:
        out = out + bias[None, :, None, None]
    return out


if __name__ == "__main__":
    x = jax.random.normal(jax.random.PRNGKey(0), (2, 4, 16, 16),
                          dtype=jnp.float32)

    # Config 1: kernel_size=3, stride=1, default padding=1 (same-size output).
    conv1 = Conv(inplanes=4, planes=8, kernel_size=3, stride=1,
                 key=jax.random.PRNGKey(1))
    y1 = jax.block_until_ready(conv1(x))
    ref1 = _reference_conv(x, conv1.weight, stride=1, padding=1)
    assert y1.shape == ref1.shape == (2, 8, 16, 16)
    assert jnp.allclose(y1, ref1, atol=1e-4, rtol=1e-4)

    # Config 2: kernel_size=3, stride=2 (exercises the strided/phase path).
    conv2 = Conv(inplanes=4, planes=8, kernel_size=3, stride=2,
                 key=jax.random.PRNGKey(2))
    y2 = jax.block_until_ready(conv2(x))
    ref2 = _reference_conv(x, conv2.weight, stride=2, padding=1)
    assert y2.shape == ref2.shape == (2, 8, 8, 8)
    assert jnp.allclose(y2, ref2, atol=1e-4, rtol=1e-4)

    # Config 3: bias=True (exercises the fused bias epilogue).
    conv3 = Conv(inplanes=4, planes=8, kernel_size=3, stride=1, bias=True,
                 key=jax.random.PRNGKey(3))
    y3 = jax.block_until_ready(conv3(x))
    ref3 = _reference_conv(x, conv3.weight, stride=1, padding=1,
                           bias=conv3.bias)
    assert y3.shape == ref3.shape == (2, 8, 16, 16)
    assert jnp.allclose(y3, ref3, atol=1e-4, rtol=1e-4)

    print("KERNEL_OK")
</pallas_src>

<mosaic_0001>
module attributes {stable_mosaic.version = 11 : i64} {
  func.func @_conv_rows_kernel(%arg0: i32, %arg1: memref<1x18x18x8xf32, #tpu.memory_space<vmem>>, %arg2: memref<9x8x128xf32, #tpu.memory_space<vmem>>, %arg3: memref<1x128xf32, #tpu.memory_space<vmem>>, %arg4: memref<1x16x16x128xf32, #tpu.memory_space<vmem>>) attributes {dimension_semantics = [#tpu.dimension_semantics<parallel>], iteration_bounds = array<i64: 2>, scalar_prefetch = 0 : i64, scratch_operands = 0 : i64, tpu.core_type = #tpu.core_type<tc>, window_params = [{transform_indices = @transform_0, window_bounds = array<i64: 1, 18, 18, 8>}, {pipeline_mode = #tpu.pipeline_mode<synchronous>, transform_indices = @transform_1, window_bounds = array<i64: 9, 8, 128>}, {pipeline_mode = #tpu.pipeline_mode<synchronous>, transform_indices = @transform_2, window_bounds = array<i64: 1, 128>}, {transform_indices = @transform_3, window_bounds = array<i64: 1, 16, 16, 128>}]} {
    %c0 = arith.constant 0 : index
    %c0_0 = arith.constant 0 : index
    %0 = vector.load %arg3[%c0, %c0_0] : memref<1x128xf32, #tpu.memory_space<vmem>>, vector<1x128xf32>
    %c0_i32 = arith.constant 0 : i32
    %c16_i32 = arith.constant 16 : i32
    %1 = arith.addi %c0_i32, %c16_i32 : i32
    %c1_i32 = arith.constant 1 : i32
    scf.for %arg5 = %c0_i32 to %1 step %c1_i32  : i32 {
      %cst = arith.constant 0.000000e+00 : f32
      %2 = vector.broadcast %cst : f32 to vector<16x128xf32>
      %c0_i32_2 = arith.constant 0 : i32
      %3 = arith.addi %c0_i32_2, %arg5 : i32
      %c0_3 = arith.constant 0 : index
      %4 = arith.index_cast %3 : i32 to index
      %c0_4 = arith.constant 0 : index
      %c0_5 = arith.constant 0 : index
      %5 = vector.load %arg1[%c0_3, %4, %c0_4, %c0_5] : memref<1x18x18x8xf32, #tpu.memory_space<vmem>>, vector<1x1x16x8xf32>
      %6 = vector.shape_cast %5 : vector<1x1x16x8xf32> to vector<16x8xf32>
      %c0_6 = arith.constant 0 : index
      %c0_7 = arith.constant 0 : index
      %c0_8 = arith.constant 0 : index
      %7 = vector.load %arg2[%c0_6, %c0_7, %c0_8] : memref<9x8x128xf32, #tpu.memory_space<vmem>>, vector<1x8x128xf32>
      %8 = vector.shape_cast %7 : vector<1x8x128xf32> to vector<8x128xf32>
      %cst_9 = arith.constant dense<0.000000e+00> : vector<16x128xf32>
      %9 = tpu.matmul %6, %8, %cst_9 {dimension_numbers = #tpu.dot_dimension_numbers<[1], [0], [0], [1], [0, 0, 1, 1], [], []>} : vector<16x8xf32>, vector<8x128xf32>, vector<16x128xf32> -> vector<16x128xf32>
      %10 = arith.addf %2, %9 : vector<16x128xf32>
      %c0_i32_10 = arith.constant 0 : i32
      %11 = arith.addi %c0_i32_10, %arg5 : i32
      %c0_11 = arith.constant 0 : index
      %12 = arith.index_cast %11 : i32 to index
      %c1 = arith.constant 1 : index
      %c0_12 = arith.constant 0 : index
      %13 = vector.load %arg1[%c0_11, %12, %c1, %c0_12] : memref<1x18x18x8xf32, #tpu.memory_space<vmem>>, vector<1x1x16x8xf32>
      %14 = vector.shape_cast %13 : vector<1x1x16x8xf32> to vector<16x8xf32>
      %c1_13 = arith.constant 1 : index
      %c0_14 = arith.constant 0 : index
      %c0_15 = arith.constant 0 : index
      %15 = vector.load %arg2[%c1_13, %c0_14, %c0_15] : memref<9x8x128xf32, #tpu.memory_space<vmem>>, vector<1x8x128xf32>
      %16 = vector.shape_cast %15 : vector<1x8x128xf32> to vector<8x128xf32>
      %cst_16 = arith.constant dense<0.000000e+00> : vector<16x128xf32>
      %17 = tpu.matmul %14, %16, %cst_16 {dimension_numbers = #tpu.dot_dimension_numbers<[1], [0], [0], [1], [0, 0, 1, 1], [], []>} : vector<16x8xf32>, vector<8x128xf32>, vector<16x128xf32> -> vector<16x128xf32>
      %18 = arith.addf %10, %17 : vector<16x128xf32>
      %c0_i32_17 = arith.constant 0 : i32
      %19 = arith.addi %c0_i32_17, %arg5 : i32
      %c0_18 = arith.constant 0 : index
      %20 = arith.index_cast %19 : i32 to index
      %c2 = arith.constant 2 : index
      %c0_19 = arith.constant 0 : index
      %21 = vector.load %arg1[%c0_18, %20, %c2, %c0_19] : memref<1x18x18x8xf32, #tpu.memory_space<vmem>>, vector<1x1x16x8xf32>
      %22 = vector.shape_cast %21 : vector<1x1x16x8xf32> to vector<16x8xf32>
      %c2_20 = arith.constant 2 : index
      %c0_21 = arith.constant 0 : index
      %c0_22 = arith.constant 0 : index
      %23 = vector.load %arg2[%c2_20, %c0_21, %c0_22] : memref<9x8x128xf32, #tpu.memory_space<vmem>>, vector<1x8x128xf32>
      %24 = vector.shape_cast %23 : vector<1x8x128xf32> to vector<8x128xf32>
      %cst_23 = arith.constant dense<0.000000e+00> : vector<16x128xf32>
      %25 = tpu.matmul %22, %24, %cst_23 {dimension_numbers = #tpu.dot_dimension_numbers<[1], [0], [0], [1], [0, 0, 1, 1], [], []>} : vector<16x8xf32>, vector<8x128xf32>, vector<16x128xf32> -> vector<16x128xf32>
      %26 = arith.addf %18, %25 : vector<16x128xf32>
      %c1_i32_24 = arith.constant 1 : i32
      %27 = arith.addi %c1_i32_24, %arg5 : i32
      %c0_25 = arith.constant 0 : index
      %28 = arith.index_cast %27 : i32 to index
      %c0_26 = arith.constant 0 : index
      %c0_27 = arith.constant 0 : index
      %29 = vector.load %arg1[%c0_25, %28, %c0_26, %c0_27] : memref<1x18x18x8xf32, #tpu.memory_space<vmem>>, vector<1x1x16x8xf32>
      %30 = vector.shape_cast %29 : vector<1x1x16x8xf32> to vector<16x8xf32>
      %c3 = arith.constant 3 : index
      %c0_28 = arith.constant 0 : index
      %c0_29 = arith.constant 0 : index
      %31 = vector.load %arg2[%c3, %c0_28, %c0_29] : memref<9x8x128xf32, #tpu.memory_space<vmem>>, vector<1x8x128xf32>
      %32 = vector.shape_cast %31 : vector<1x8x128xf32> to vector<8x128xf32>
      %cst_30 = arith.constant dense<0.000000e+00> : vector<16x128xf32>
      %33 = tpu.matmul %30, %32, %cst_30 {dimension_numbers = #tpu.dot_dimension_numbers<[1], [0], [0], [1], [0, 0, 1, 1], [], []>} : vector<16x8xf32>, vector<8x128xf32>, vector<16x128xf32> -> vector<16x128xf32>
      %34 = arith.addf %26, %33 : vector<16x128xf32>
      %c1_i32_31 = arith.constant 1 : i32
      %35 = arith.addi %c1_i32_31, %arg5 : i32
      %c0_32 = arith.constant 0 : index
      %36 = arith.index_cast %35 : i32 to index
      %c1_33 = arith.constant 1 : index
      %c0_34 = arith.constant 0 : index
      %37 = vector.load %arg1[%c0_32, %36, %c1_33, %c0_34] : memref<1x18x18x8xf32, #tpu.memory_space<vmem>>, vector<1x1x16x8xf32>
      %38 = vector.shape_cast %37 : vector<1x1x16x8xf32> to vector<16x8xf32>
      %c4 = arith.constant 4 : index
      %c0_35 = arith.constant 0 : index
      %c0_36 = arith.constant 0 : index
      %39 = vector.load %arg2[%c4, %c0_35, %c0_36] : memref<9x8x128xf32, #tpu.memory_space<vmem>>, vector<1x8x128xf32>
      %40 = vector.shape_cast %39 : vector<1x8x128xf32> to vector<8x128xf32>
      %cst_37 = arith.constant dense<0.000000e+00> : vector<16x128xf32>
      %41 = tpu.matmul %38, %40, %cst_37 {dimension_numbers = #tpu.dot_dimension_numbers<[1], [0], [0], [1], [0, 0, 1, 1], [], []>} : vector<16x8xf32>, vector<8x128xf32>, vector<16x128xf32> -> vector<16x128xf32>
      %42 = arith.addf %34, %41 : vector<16x128xf32>
      %c1_i32_38 = arith.constant 1 : i32
      %43 = arith.addi %c1_i32_38, %arg5 : i32
      %c0_39 = arith.constant 0 : index
      %44 = arith.index_cast %43 : i32 to index
      %c2_40 = arith.constant 2 : index
      %c0_41 = arith.constant 0 : index
      %45 = vector.load %arg1[%c0_39, %44, %c2_40, %c0_41] : memref<1x18x18x8xf32, #tpu.memory_space<vmem>>, vector<1x1x16x8xf32>
      %46 = vector.shape_cast %45 : vector<1x1x16x8xf32> to vector<16x8xf32>
      %c5 = arith.constant 5 : index
      %c0_42 = arith.constant 0 : index
      %c0_43 = arith.constant 0 : index
      %47 = vector.load %arg2[%c5, %c0_42, %c0_43] : memref<9x8x128xf32, #tpu.memory_space<vmem>>, vector<1x8x128xf32>
      %48 = vector.shape_cast %47 : vector<1x8x128xf32> to vector<8x128xf32>
      %cst_44 = arith.constant dense<0.000000e+00> : vector<16x128xf32>
      %49 = tpu.matmul %46, %48, %cst_44 {dimension_numbers = #tpu.dot_dimension_numbers<[1], [0], [0], [1], [0, 0, 1, 1], [], []>} : vector<16x8xf32>, vector<8x128xf32>, vector<16x128xf32> -> vector<16x128xf32>
      %50 = arith.addf %42, %49 : vector<16x128xf32>
      %c2_i32 = arith.constant 2 : i32
      %51 = arith.addi %c2_i32, %arg5 : i32
      %c0_45 = arith.constant 0 : index
      %52 = arith.index_cast %51 : i32 to index
      %c0_46 = arith.constant 0 : index
      %c0_47 = arith.constant 0 : index
      %53 = vector.load %arg1[%c0_45, %52, %c0_46, %c0_47] : memref<1x18x18x8xf32, #tpu.memory_space<vmem>>, vector<1x1x16x8xf32>
      %54 = vector.shape_cast %53 : vector<1x1x16x8xf32> to vector<16x8xf32>
      %c6 = arith.constant 6 : index
      %c0_48 = arith.constant 0 : index
      %c0_49 = arith.constant 0 : index
      %55 = vector.load %arg2[%c6, %c0_48, %c0_49] : memref<9x8x128xf32, #tpu.memory_space<vmem>>, vector<1x8x128xf32>
      %56 = vector.shape_cast %55 : vector<1x8x128xf32> to vector<8x128xf32>
      %cst_50 = arith.constant dense<0.000000e+00> : vector<16x128xf32>
      %57 = tpu.matmul %54, %56, %cst_50 {dimension_numbers = #tpu.dot_dimension_numbers<[1], [0], [0], [1], [0, 0, 1, 1], [], []>} : vector<16x8xf32>, vector<8x128xf32>, vector<16x128xf32> -> vector<16x128xf32>
      %58 = arith.addf %50, %57 : vector<16x128xf32>
      %c2_i32_51 = arith.constant 2 : i32
      %59 = arith.addi %c2_i32_51, %arg5 : i32
      %c0_52 = arith.constant 0 : index
      %60 = arith.index_cast %59 : i32 to index
      %c1_53 = arith.constant 1 : index
      %c0_54 = arith.constant 0 : index
      %61 = vector.load %arg1[%c0_52, %60, %c1_53, %c0_54] : memref<1x18x18x8xf32, #tpu.memory_space<vmem>>, vector<1x1x16x8xf32>
      %62 = vector.shape_cast %61 : vector<1x1x16x8xf32> to vector<16x8xf32>
      %c7 = arith.constant 7 : index
      %c0_55 = arith.constant 0 : index
      %c0_56 = arith.constant 0 : index
      %63 = vector.load %arg2[%c7, %c0_55, %c0_56] : memref<9x8x128xf32, #tpu.memory_space<vmem>>, vector<1x8x128xf32>
      %64 = vector.shape_cast %63 : vector<1x8x128xf32> to vector<8x128xf32>
      %cst_57 = arith.constant dense<0.000000e+00> : vector<16x128xf32>
      %65 = tpu.matmul %62, %64, %cst_57 {dimension_numbers = #tpu.dot_dimension_numbers<[1], [0], [0], [1], [0, 0, 1, 1], [], []>} : vector<16x8xf32>, vector<8x128xf32>, vector<16x128xf32> -> vector<16x128xf32>
      %66 = arith.addf %58, %65 : vector<16x128xf32>
      %c2_i32_58 = arith.constant 2 : i32
      %67 = arith.addi %c2_i32_58, %arg5 : i32
      %c0_59 = arith.constant 0 : index
      %68 = arith.index_cast %67 : i32 to index
      %c2_60 = arith.constant 2 : index
      %c0_61 = arith.constant 0 : index
      %69 = vector.load %arg1[%c0_59, %68, %c2_60, %c0_61] : memref<1x18x18x8xf32, #tpu.memory_space<vmem>>, vector<1x1x16x8xf32>
      %70 = vector.shape_cast %69 : vector<1x1x16x8xf32> to vector<16x8xf32>
      %c8 = arith.constant 8 : index
      %c0_62 = arith.constant 0 : index
      %c0_63 = arith.constant 0 : index
      %71 = vector.load %arg2[%c8, %c0_62, %c0_63] : memref<9x8x128xf32, #tpu.memory_space<vmem>>, vector<1x8x128xf32>
      %72 = vector.shape_cast %71 : vector<1x8x128xf32> to vector<8x128xf32>
      %cst_64 = arith.constant dense<0.000000e+00> : vector<16x128xf32>
      %73 = tpu.matmul %70, %72, %cst_64 {dimension_numbers = #tpu.dot_dimension_numbers<[1], [0], [0], [1], [0, 0, 1, 1], [], []>} : vector<16x8xf32>, vector<8x128xf32>, vector<16x128xf32> -> vector<16x128xf32>
      %74 = arith.addf %66, %73 : vector<16x128xf32>
      %75 = vector.broadcast %0 : vector<1x128xf32> to vector<16x128xf32>
      %76 = arith.addf %74, %75 : vector<16x128xf32>
      %c0_65 = arith.constant 0 : index
      %77 = arith.index_cast %arg5 : i32 to index
      %c0_66 = arith.constant 0 : index
      %c0_67 = arith.constant 0 : index
      %78 = vector.load %arg4[%c0_65, %77, %c0_66, %c0_67] : memref<1x16x16x128xf32, #tpu.memory_space<vmem>>, vector<1x1x16x128xf32>
      %79 = vector.shape_cast %78 : vector<1x1x16x128xf32> to vector<16x128xf32>
      %80 = vector.shape_cast %76 : vector<16x128xf32> to vector<1x1x16x128xf32>
      tpu.vector_store %arg4[%c0_65, %77, %c0_66, %c0_67], %80 {strides = array<i32>} : memref<1x16x16x128xf32, #tpu.memory_space<vmem>>, vector<1x1x16x128xf32>,
    }
    %c16_i32_1 = arith.constant 16 : i32
    return
  }
  func.func @transform_0(%arg0: i32) -> (i32, i32, i32, i32) {
    %c0_i32 = arith.constant 0 : i32
    %c0_i32_0 = arith.constant 0 : i32
    %c0_i32_1 = arith.constant 0 : i32
    %c0_i32_2 = arith.constant 0 : i32
    return %arg0, %c0_i32, %c0_i32_0, %c0_i32_1 : i32, i32, i32, i32
  }
  func.func @transform_1(%arg0: i32) -> (i32, i32, i32) {
    %c0_i32 = arith.constant 0 : i32
    %c0_i32_0 = arith.constant 0 : i32
    %c0_i32_1 = arith.constant 0 : i32
    %c0_i32_2 = arith.constant 0 : i32
    return %c0_i32, %c0_i32_0, %c0_i32_1 : i32, i32, i32
  }
  func.func @transform_2(%arg0: i32) -> (i32, i32) {
    %c0_i32 = arith.constant 0 : i32
    %c0_i32_0 = arith.constant 0 : i32
    %c0_i32_1 = arith.constant 0 : i32
    return %c0_i32, %c0_i32_0 : i32, i32
  }
  func.func @transform_3(%arg0: i32) -> (i32, i32, i32, i32) {
    %c0_i32 = arith.constant 0 : i32
    %c0_i32_0 = arith.constant 0 : i32
    %c0_i32_1 = arith.constant 0 : i32
    %c0_i32_2 = arith.constant 0 : i32
    return %arg0, %c0_i32, %c0_i32_0, %c0_i32_1 : i32, i32, i32, i32
  }
}

</mosaic_0001>

<llo_original>
// kernel: tpu_custom_call.1
$region0: #{tpu_custom_call.1}
  #allocation0 [shape = 'u32[]', space=smem, size = 0x4, offset = 0x4, fixed_abs, tag = 'smem constant byte address 0x4 - core index']
  #allocation1 [shape = 'u32[72,128]{1,0:T(1,128)}', space=vmem, size = 0x9000, scoped, tag = 'internal scratch']
  %s0 = inlined_call_operand.vmem [shape: f32[2,18,18,8], index: 0, kind: input, shape index: {}]
  %s1 = inlined_call_operand.vmem [shape: f32[9,8,128], index: 1, kind: input, shape index: {}]
  %s2 = inlined_call_operand.vmem [shape: f32[1,128], index: 2, kind: input, shape index: {}]
  %s3 = inlined_call_operand.hbm [shape: f32[2,16,16,128], index: 3, kind: output, shape index: {}]
  %s4 = sld [smem:[#allocation0]]
  $region52: #{tpu_custom_call.1} parent=0
    _
  %s6 = ssub.s32 1, %s4
  %s7 = scalar_select 0, %s6, %s4
  $region1: #{tpu_custom_call.1} parent=0
    #allocation2 [shape = 'u8[262144]{0}', space=vmem, size = 0x40000, scoped, tag = 'output window, operand 0']
    #allocation3 [shape = 's32[2]{0}', space=sflag, size = 0x8, scoped, tag = 'scoped memory for tpu_custom_call.1']
    %8 = vsyncpa [#allocation3], 0
    %s9 = scalar_lea.sflag [#allocation3], 1
    %10 = vsyncpa %s9, 0
    loop: start=0, step=1, limit=4
    $region2: #{tpu_custom_call.1} parent=1 // loop_pre_header
      _
    $region3: #{tpu_custom_call.1} parent=1 // loop_header
      %s12 = sphi 0, %s16
      %p13 = scmp.ge.s32.totalorder %s12, 4
      %s22 = sphi 0, %s24
      %s25 = sphi 0, %s22
      %s26 = sphi 0, %s25
      %s42 = sphi 0, %s26
      %s46 = sphi 0, %s46
      %s48 = sphi 0, %s46
      %s49 = sphi 0, %s48
      %s63 = sphi 0, %s49
      %s67 = sphi 0, %s67
      %s69 = sphi 0, %s67
      %s70 = sphi 0, %s69
      %s84 = sphi 0, %s70
      %s90 = sphi 0, %s92
      %s93 = sphi 0, %s90
      %s94 = sphi 0, %s93
      %s110 = sphi 0, %s94
    $region4: #{tpu_custom_call.1} parent=1 // loop_header_branch
      %15 = sbr.rel (%p13) target = $region8
    $region5: #{tpu_custom_call.1} parent=1 // loop_body
      %s17 = ssub.s32 %s12, 1
      %s18 = ssub.s32 %s12, 2
      %s19 = sadd.s32 %s12, 1
      %s20 = ssub.s32 %s12, %s19
      %p21 = scmp.eq.s32.totalorder %s20, 0
      %s23 = sadd.s32 %s22, 1
      %s24 = scalar_select %p21, %s22, %s23
      %p27 = pneg %p21
      %p28 = scmp.eq.s32.totalorder %s12, 1
      %p29 = por %p27, %p28
      %p30 = scmp.ne.s32.totalorder %s22, %s25
      %p31 = scmp.eq.s32.totalorder %s12, 0
      %p32 = por %p30, %p31
      %p33 = scmp.ne.s32.totalorder %s22, %s25
      %p34 = scmp.eq.s32.totalorder %s17, 1
      %p35 = por %p33, %p34
      %p36 = scmp.ne.s32.totalorder %s25, %s26
      %p37 = scmp.eq.s32.totalorder %s17, 0
      %p38 = por %p36, %p37
      %p39 = scmp.ne.s32.totalorder %s25, %s26
      %p40 = scmp.eq.s32.totalorder %s18, 1
      %p41 = por %p39, %p40
      %p43 = scmp.ne.s32.totalorder %s26, %s42
      %p44 = scmp.eq.s32.totalorder %s18, 0
      %p45 = por %p43, %p44
      %s47 = sadd.s32 %s46, 1
      %p50 = scmp.eq.s32.totalorder %s12, 1
      %p51 = scmp.ne.s32.totalorder %s46, %s48
      %p52 = scmp.eq.s32.totalorder %s12, 0
      %p53 = por %p51, %p52
      %p54 = scmp.ne.s32.totalorder %s46, %s48
      %p55 = scmp.eq.s32.totalorder %s17, 1
      %p56 = por %p54, %p55
      %p57 = scmp.ne.s32.totalorder %s48, %s49
      %p58 = scmp.eq.s32.totalorder %s17, 0
      %p59 = por %p57, %p58
      %p60 = scmp.ne.s32.totalorder %s48, %s49
      %p61 = scmp.eq.s32.totalorder %s18, 1
      %p62 = por %p60, %p61
      %p64 = scmp.ne.s32.totalorder %s49, %s63
      %p65 = scmp.eq.s32.totalorder %s18, 0
      %p66 = por %p64, %p65
      %s68 = sadd.s32 %s67, 1
      %p71 = scmp.eq.s32.totalorder %s12, 1
      %p72 = scmp.ne.s32.totalorder %s67, %s69
      %p73 = scmp.eq.s32.totalorder %s12, 0
      %p74 = por %p72, %p73
      %p75 = scmp.ne.s32.totalorder %s67, %s69
      %p76 = scmp.eq.s32.totalorder %s17, 1
      %p77 = por %p75, %p76
      %p78 = scmp.ne.s32.totalorder %s69, %s70
      %p79 = scmp.eq.s32.totalorder %s17, 0
      %p80 = por %p78, %p79
      %p81 = scmp.ne.s32.totalorder %s69, %s70
      %p82 = scmp.eq.s32.totalorder %s18, 1
      %p83 = por %p81, %p82
      %p85 = scmp.ne.s32.totalorder %s70, %s84
      %p86 = scmp.eq.s32.totalorder %s18, 0
      %p87 = por %p85, %p86
      %s88 = ssub.s32 %s12, %s19
      %p89 = scmp.eq.s32.totalorder %s88, 0
      %s91 = sadd.s32 %s90, 1
      %s92 = scalar_select %p89, %s90, %s91
      %p95 = pneg %p89
      %p96 = scmp.eq.s32.totalorder %s12, 1
      %p97 = por %p95, %p96
      %p98 = scmp.ne.s32.totalorder %s90, %s93
      %p99 = scmp.eq.s32.totalorder %s12, 0
      %p100 = por %p98, %p99
      %p101 = scmp.ne.s32.totalorder %s90, %s93
      %p102 = scmp.eq.s32.totalorder %s17, 1
      %p103 = por %p101, %p102
      %p104 = scmp.ne.s32.totalorder %s93, %s94
      %p105 = scmp.eq.s32.totalorder %s17, 0
      %p106 = por %p104, %p105
      %p107 = scmp.ne.s32.totalorder %s93, %s94
      %p108 = scmp.eq.s32.totalorder %s18, 1
      %p109 = por %p107, %p108
      %p111 = scmp.ne.s32.totalorder %s94, %s110
      %p112 = scmp.eq.s32.totalorder %s18, 0
      %p113 = por %p111, %p112
      %p114 = scmp.le.s32.totalorder 1, %s12
      %p115 = scmp.lt.s32.totalorder %s12, 3
      %p116 = pnand %p114, %p115
      %p117 = pneg %p116
      // Predicated region
      $region9: #{tpu_custom_call.1} parent=5 // pred_check
        _
      $region10: #{tpu_custom_call.1} parent=5 // pred_check_branch
        %119 = sbr.rel (%p116) target = $region12
      $region11: #{tpu_custom_call.1} parent=5 // pred_region
        %s120 = ssub.s32 %s12, 1
        // Predicated region
        $region13: #{tpu_custom_call.1} parent=11 // pred_check
          %p121 = pneg %p59
        $region14: #{tpu_custom_call.1} parent=11 // pred_check_branch
          %123 = sbr.rel (%p121) target = $region16
        $region15: #{tpu_custom_call.1} parent=11 // pred_region
          _
        $region16: #{tpu_custom_call.1} parent=11 // pred_fallthru
          _
        // Predicated region
        $region17: #{tpu_custom_call.1} parent=11 // pred_check
          %p124 = pneg %p80
        $region18: #{tpu_custom_call.1} parent=11 // pred_check_branch
          %126 = sbr.rel (%p124) target = $region20
        $region19: #{tpu_custom_call.1} parent=11 // pred_region
          _
        $region20: #{tpu_custom_call.1} parent=11 // pred_fallthru
          _
      $region12: #{tpu_custom_call.1} parent=5 // pred_fallthru
        _
      %p127 = scmp.lt.s32.totalorder %s12, 2
      // Predicated region
      $region21: #{tpu_custom_call.1} parent=5 // pred_check
        %p128 = pneg %p127
      $region22: #{tpu_custom_call.1} parent=5 // pred_check_branch
        %130 = sbr.rel (%p128) target = $region24
      $region23: #{tpu_custom_call.1} parent=5 // pred_region
        // Predicated region
        $region25: #{tpu_custom_call.1} parent=23 // pred_check
          %p131 = pneg %p32
        $region26: #{tpu_custom_call.1} parent=23 // pred_check_branch
          %133 = sbr.rel (%p131) target = $region28
        $region27: #{tpu_custom_call.1} parent=23 // pred_region
          %p134 = scmp.lt.s32.totalorder %s12, 1
          %s135 = scalar_select %p134, %s12, 1
          %s136 = smul.addr %s135, 54
          %s137 = smul.addr %s136, 8
          %s138 = scalar_lea.vmem %s0, %s137
        $region28: #{tpu_custom_call.1} parent=23 // pred_fallthru
          _
      $region24: #{tpu_custom_call.1} parent=5 // pred_fallthru
        _
      %p139 = scmp.le.s32.totalorder 1, %s12
      %p140 = scmp.lt.s32.totalorder %s12, 3
      %p141 = pnand %p139, %p140
      %p142 = pneg %p141
      // Predicated region
      $region29: #{tpu_custom_call.1} parent=5 // pred_check
        _
      $region30: #{tpu_custom_call.1} parent=5 // pred_check_branch
        %144 = sbr.rel (%p141) target = $region32
      $region31: #{tpu_custom_call.1} parent=5 // pred_region
        %s145 = ssub.s32 %s12, 1
        %p146 = scmp.lt.s32.totalorder %s17, 1
        %s147 = scalar_select %p146, %s17, 1
        %s148 = smul.addr %s147, 54
        %s149 = smul.addr %s148, 8
        %s150 = scalar_lea.vmem %s0, %s149
        %p151 = pneg %p38
        %p152 = pneg %p35
        %p153 = pneg %p59
        %p154 = pneg %p56
        %p155 = pneg %p80
        %p156 = pneg %p77
        %p157 = pneg %p106
        %p158 = pneg %p103
        %s159 = sand.u32 %s93, 1
        %s160 = scalar_lea.sflag [#allocation3], %s159
        %s161 = sand.u32 %s93, 1
        %s162 = smul.addr %s161, 256
        %s163 = scalar_lea.vmem [#allocation2], %s162
        %p164 = scmp.lt.s32.totalorder %s17, 1
        %s165 = scalar_select %p164, %s17, 1
        %s166 = smul.addr %s165, 54
        %s167 = smul.addr %s166, 8
        %s168 = scalar_lea.vmem %s0, %s167
        %v169 = vld [vmem:[%s2] sm:$0x1]
        loop: start=0, step=1, limit=16
        $region33: #{tpu_custom_call.1} parent=31 // loop_pre_header
          _
        $region34: #{tpu_custom_call.1} parent=31 // loop_header
          %s171 = sphi 0, %s175
          %p172 = scmp.ge.s32.totalorder %s171, 16
        $region35: #{tpu_custom_call.1} parent=31 // loop_header_branch
          %174 = sbr.rel (%p172) target = $region39
        $region36: #{tpu_custom_call.1} parent=31 // loop_body
          %s176 = smul.u32 %s171, 24
          %s177 = scalar_lea.vmem %s168, %s176
          %v178 = vld [vmem:[%s177] sm:$0xff]
          %v179 = vld [vmem:[%s177 + $0x8] sm:$0xff]
          %v180 = vld [vmem:[%s1] sm:$0xff]
          %v181 = vld [vmem:[%s177 + $0x1] sm:$0xff]
          %v182 = vld [vmem:[%s177 + $0x9] sm:$0xff]
          %s183 = scalar_lea.vmem %s1, 8
          %v184 = vld [vmem:[%s183] sm:$0xff]
          %vm185 = vcmask 64512
          %v187 = vsel %vm185, %v181, 0
          %v190 = vsel %vm185, %v182, 0
          %192 = vmatpush.msra.mxu0 0.0
          %193 = vmatpush.msra.mxu0 0.0
          %194 = vmatpush.msra.mxu0 0.0
          %195 = vmatpush.msra.mxu0 0.0
          %196 = vmatpush.msra.mxu0 0.0
          %197 = vmatpush.msra.mxu0 0.0
          %198 = vmatpush.msra.mxu0 0.0
          %199 = vmatpush.msra.mxu0 0.0
          %200 = vmatpush.msra.mxu0 0.0
          %201 = vmatpush.msra.mxu0 0.0
          %202 = vmatpush.msra.mxu0 0.0
          %203 = vmatpush.msra.mxu0 0.0
          %204 = vmatpush.msra.mxu0 0.0
          %205 = vmatpush.msra.mxu0 0.0
          %206 = vmatpush.msra.mxu0 0.0
          %207 = vmatpush.msra.mxu0 %v184
          %208 = vmatmul.f32.gmra.mxu0 %v187
          %v209 = vpop.f32.mrf.mxu0
          %v210 = vadd.f32 0.0, %v209
          %211 = vmatmul.f32.gmra.mxu0 %v190
          %v212 = vpop.f32.mrf.mxu0
          %v213 = vadd.f32 0.0, %v212
          %214 = vdwg.mxu0
          %v216 = vsel %vm185, %v178, 0
          %v219 = vsel %vm185, %v179, 0
          %221 = vmatpush.msra.mxu0 0.0
          %222 = vmatpush.msra.mxu0 0.0
          %223 = vmatpush.msra.mxu0 0.0
          %224 = vmatpush.msra.mxu0 0.0
          %225 = vmatpush.msra.mxu0 0.0
          %226 = vmatpush.msra.mxu0 0.0
          %227 = vmatpush.msra.mxu0 0.0
          %228 = vmatpush.msra.mxu0 0.0
          %229 = vmatpush.msra.mxu0 0.0
          %230 = vmatpush.msra.mxu0 0.0
          %231 = vmatpush.msra.mxu0 0.0
          %232 = vmatpush.msra.mxu0 0.0
          %233 = vmatpush.msra.mxu0 0.0
          %234 = vmatpush.msra.mxu0 0.0
          %235 = vmatpush.msra.mxu0 0.0
          %236 = vmatpush.msra.mxu0 %v180
          %237 = vmatmul.f32.gmra.mxu0 %v216
          %v238 = vpop.f32.mrf.mxu0
          %v239 = vadd.f32 %v210, %v238
          %240 = vmatmul.f32.gmra.mxu0 %v219
          %v241 = vpop.f32.mrf.mxu0
          %v242 = vadd.f32 %v213, %v241
          %243 = vdwg.mxu0
          %v244 = vld [vmem:[%s177 + $0x2] sm:$0xff]
          %v245 = vld [vmem:[%s177 + $0xa] sm:$0xff]
          %s246 = scalar_lea.vmem %s1, 16
          %v247 = vld [vmem:[%s246] sm:$0xff]
          %v249 = vsel %vm185, %v244, 0
          %v252 = vsel %vm185, %v245, 0
          %254 = vmatpush.msra.mxu0 0.0
          %255 = vmatpush.msra.mxu0 0.0
          %256 = vmatpush.msra.mxu0 0.0
          %257 = vmatpush.msra.mxu0 0.0
          %258 = vmatpush.msra.mxu0 0.0
          %259 = vmatpush.msra.mxu0 0.0
          %260 = vmatpush.msra.mxu0 0.0
          %261 = vmatpush.msra.mxu0 0.0
          %262 = vmatpush.msra.mxu0 0.0
          %263 = vmatpush.msra.mxu0 0.0
          %264 = vmatpush.msra.mxu0 0.0
          %265 = vmatpush.msra.mxu0 0.0
          %266 = vmatpush.msra.mxu0 0.0
          %267 = vmatpush.msra.mxu0 0.0
          %268 = vmatpush.msra.mxu0 0.0
          %269 = vmatpush.msra.mxu0 %v247
          %270 = vmatmul.f32.gmra.mxu0 %v249
          %v271 = vpop.f32.mrf.mxu0
          %v272 = vadd.f32 0.0, %v271
          %273 = vmatmul.f32.gmra.mxu0 %v252
          %v274 = vpop.f32.mrf.mxu0
          %v275 = vadd.f32 0.0, %v274
          %276 = vdwg.mxu0
          %v277 = vadd.f32 %v239, %v272
          %v278 = vadd.f32 %v242, %v275
          %s279 = sadd.s32 %s171, 1
          %s280 = smul.u32 %s279, 24
          %s281 = scalar_lea.vmem %s168, %s280
          %v282 = vld [vmem:[%s281] sm:$0xff]
          %v283 = vld [vmem:[%s281 + $0x8] sm:$0xff]
          %s284 = scalar_lea.vmem %s1, 24
          %v285 = vld [vmem:[%s284] sm:$0xff]
          %v287 = vsel %vm185, %v282, 0
          %v290 = vsel %vm185, %v283, 0
          %292 = vmatpush.msra.mxu0 0.0
          %293 = vmatpush.msra.mxu0 0.0
          %294 = vmatpush.msra.mxu0 0.0
          %295 = vmatpush.msra.mxu0 0.0
          %296 = vmatpush.msra.mxu0 0.0
          %297 = vmatpush.msra.mxu0 0.0
          %298 = vmatpush.msra.mxu0 0.0
          %299 = vmatpush.msra.mxu0 0.0
          %300 = vmatpush.msra.mxu0 0.0
          %301 = vmatpush.msra.mxu0 0.0
          %302 = vmatpush.msra.mxu0 0.0
          %303 = vmatpush.msra.mxu0 0.0
          %304 = vmatpush.msra.mxu0 0.0
          %305 = vmatpush.msra.mxu0 0.0
          %306 = vmatpush.msra.mxu0 0.0
          %307 = vmatpush.msra.mxu0 %v285
          %308 = vmatmul.f32.gmra.mxu0 %v287
          %v309 = vpop.f32.mrf.mxu0
          %v310 = vadd.f32 0.0, %v309
          %311 = vmatmul.f32.gmra.mxu0 %v290
          %v312 = vpop.f32.mrf.mxu0
          %v313 = vadd.f32 0.0, %v312
          %314 = vdwg.mxu0
          %v315 = vadd.f32 %v277, %v310
          %v316 = vadd.f32 %v278, %v313
          %v317 = vld [vmem:[%s281 + $0x1] sm:$0xff]
          %v318 = vld [vmem:[%s281 + $0x9] sm:$0xff]
          %s319 = scalar_lea.vmem %s1, 32
          %v320 = vld [vmem:[%s319] sm:$0xff]
          %v322 = vsel %vm185, %v317, 0
          %v325 = vsel %vm185, %v318, 0
          %327 = vmatpush.msra.mxu0 0.0
          %328 = vmatpush.msra.mxu0 0.0
          %329 = vmatpush.msra.mxu0 0.0
          %330 = vmatpush.msra.mxu0 0.0
          %331 = vmatpush.msra.mxu0 0.0
          %332 = vmatpush.msra.mxu0 0.0
          %333 = vmatpush.msra.mxu0 0.0
          %334 = vmatpush.msra.mxu0 0.0
          %335 = vmatpush.msra.mxu0 0.0
          %336 = vmatpush.msra.mxu0 0.0
          %337 = vmatpush.msra.mxu0 0.0
          %338 = vmatpush.msra.mxu0 0.0
          %339 = vmatpush.msra.mxu0 0.0
          %340 = vmatpush.msra.mxu0 0.0
          %341 = vmatpush.msra.mxu0 0.0
          %342 = vmatpush.msra.mxu0 %v320
          %343 = vmatmul.f32.gmra.mxu0 %v322
          %v344 = vpop.f32.mrf.mxu0
          %v345 = vadd.f32 0.0, %v344
          %346 = vmatmul.f32.gmra.mxu0 %v325
          %v347 = vpop.f32.mrf.mxu0
          %v348 = vadd.f32 0.0, %v347
          %349 = vdwg.mxu0
          %v350 = vadd.f32 %v315, %v345
          %v351 = vadd.f32 %v316, %v348
          %v352 = vld [vmem:[%s281 + $0x2] sm:$0xff]
          %v353 = vld [vmem:[%s281 + $0xa] sm:$0xff]
          %s354 = scalar_lea.vmem %s1, 40
          %v355 = vld [vmem:[%s354] sm:$0xff]
          %v357 = vsel %vm185, %v352, 0
          %v360 = vsel %vm185, %v353, 0
          %362 = vmatpush.msra.mxu0 0.0
          %363 = vmatpush.msra.mxu0 0.0
          %364 = vmatpush.msra.mxu0 0.0
          %365 = vmatpush.msra.mxu0 0.0
          %366 = vmatpush.msra.mxu0 0.0
          %367 = vmatpush.msra.mxu0 0.0
          %368 = vmatpush.msra.mxu0 0.0
          %369 = vmatpush.msra.mxu0 0.0
          %370 = vmatpush.msra.mxu0 0.0
          %371 = vmatpush.msra.mxu0 0.0
          %372 = vmatpush.msra.mxu0 0.0
          %373 = vmatpush.msra.mxu0 0.0
          %374 = vmatpush.msra.mxu0 0.0
          %375 = vmatpush.msra.mxu0 0.0
          %376 = vmatpush.msra.mxu0 0.0
          %377 = vmatpush.msra.mxu0 %v355
          %378 = vmatmul.f32.gmra.mxu0 %v357
          %v379 = vpop.f32.mrf.mxu0
          %v380 = vadd.f32 0.0, %v379
          %381 = vmatmul.f32.gmra.mxu0 %v360
          %v382 = vpop.f32.mrf.mxu0
          %v383 = vadd.f32 0.0, %v382
          %384 = vdwg.mxu0
          %v385 = vadd.f32 %v350, %v380
          %v386 = vadd.f32 %v351, %v383
          %s387 = sadd.s32 %s171, 2
          %s388 = smul.u32 %s387, 24
          %s389 = scalar_lea.vmem %s168, %s388
          %v390 = vld [vmem:[%s389] sm:$0xff]
          %v391 = vld [vmem:[%s389 + $0x8] sm:$0xff]
          %s392 = scalar_lea.vmem %s1, 48
          %v393 = vld [vmem:[%s392] sm:$0xff]
          %v395 = vsel %vm185, %v390, 0
          %v398 = vsel %vm185, %v391, 0
          %400 = vmatpush.msra.mxu0 0.0
          %401 = vmatpush.msra.mxu0 0.0
          %402 = vmatpush.msra.mxu0 0.0
          %403 = vmatpush.msra.mxu0 0.0
          %404 = vmatpush.msra.mxu0 0.0
          %405 = vmatpush.msra.mxu0 0.0
          %406 = vmatpush.msra.mxu0 0.0
          %407 = vmatpush.msra.mxu0 0.0
          %408 = vmatpush.msra.mxu0 0.0
          %409 = vmatpush.msra.mxu0 0.0
          %410 = vmatpush.msra.mxu0 0.0
          %411 = vmatpush.msra.mxu0 0.0
          %412 = vmatpush.msra.mxu0 0.0
          %413 = vmatpush.msra.mxu0 0.0
          %414 = vmatpush.msra.mxu0 0.0
          %415 = vmatpush.msra.mxu0 %v393
          %416 = vmatmul.f32.gmra.mxu0 %v395
          %v417 = vpop.f32.mrf.mxu0
          %v418 = vadd.f32 0.0, %v417
          %419 = vmatmul.f32.gmra.mxu0 %v398
          %v420 = vpop.f32.mrf.mxu0
          %v421 = vadd.f32 0.0, %v420
          %422 = vdwg.mxu0
          %v423 = vadd.f32 %v385, %v418
          %v424 = vadd.f32 %v386, %v421
          %v425 = vld [vmem:[%s389 + $0x1] sm:$0xff]
          %v426 = vld [vmem:[%s389 + $0x9] sm:$0xff]
          %s427 = scalar_lea.vmem %s1, 56
          %v428 = vld [vmem:[%s427] sm:$0xff]
          %v430 = vsel %vm185, %v425, 0
          %v433 = vsel %vm185, %v426, 0
          %435 = vmatpush.msra.mxu0 0.0
          %436 = vmatpush.msra.mxu0 0.0
          %437 = vmatpush.msra.mxu0 0.0
          %438 = vmatpush.msra.mxu0 0.0
          %439 = vmatpush.msra.mxu0 0.0
          %440 = vmatpush.msra.mxu0 0.0
          %441 = vmatpush.msra.mxu0 0.0
          %442 = vmatpush.msra.mxu0 0.0
          %443 = vmatpush.msra.mxu0 0.0
          %444 = vmatpush.msra.mxu0 0.0
          %445 = vmatpush.msra.mxu0 0.0
          %446 = vmatpush.msra.mxu0 0.0
          %447 = vmatpush.msra.mxu0 0.0
          %448 = vmatpush.msra.mxu0 0.0
          %449 = vmatpush.msra.mxu0 0.0
          %450 = vmatpush.msra.mxu0 %v428
          %451 = vmatmul.f32.gmra.mxu0 %v430
          %v452 = vpop.f32.mrf.mxu0
          %v453 = vadd.f32 0.0, %v452
          %454 = vmatmul.f32.gmra.mxu0 %v433
          %v455 = vpop.f32.mrf.mxu0
          %v456 = vadd.f32 0.0, %v455
          %457 = vdwg.mxu0
          %v458 = vadd.f32 %v423, %v453
          %v459 = vadd.f32 %v424, %v456
          %v460 = vld [vmem:[%s389 + $0x2] sm:$0xff]
          %v461 = vld [vmem:[%s389 + $0xa] sm:$0xff]
          %s462 = scalar_lea.vmem %s1, 64
          %v463 = vld [vmem:[%s462] sm:$0xff]
          %v465 = vsel %vm185, %v460, 0
          %v468 = vsel %vm185, %v461, 0
          %470 = vmatpush.msra.mxu0 0.0
          %471 = vmatpush.msra.mxu0 0.0
          %472 = vmatpush.msra.mxu0 0.0
          %473 = vmatpush.msra.mxu0 0.0
          %474 = vmatpush.msra.mxu0 0.0
          %475 = vmatpush.msra.mxu0 0.0
          %476 = vmatpush.msra.mxu0 0.0
          %477 = vmatpush.msra.mxu0 0.0
          %478 = vmatpush.msra.mxu0 0.0
          %479 = vmatpush.msra.mxu0 0.0
          %480 = vmatpush.msra.mxu0 0.0
          %481 = vmatpush.msra.mxu0 0.0
          %482 = vmatpush.msra.mxu0 0.0
          %483 = vmatpush.msra.mxu0 0.0
          %484 = vmatpush.msra.mxu0 0.0
          %485 = vmatpush.msra.mxu0 %v463
          %486 = vmatmul.f32.gmra.mxu0 %v465
          %v487 = vpop.f32.mrf.mxu0
          %v488 = vadd.f32 0.0, %v487
          %489 = vmatmul.f32.gmra.mxu0 %v468
          %v490 = vpop.f32.mrf.mxu0
          %v491 = vadd.f32 0.0, %v490
          %492 = vdwg.mxu0
          %v493 = vadd.f32 %v458, %v488
          %v494 = vadd.f32 %v459, %v491
          %v496 = vperm.slane %v169, 0
          %v498 = vadd.f32 %v493, %v496
          %v499 = vadd.f32 %v494, %v496
          %s500 = smul.u32 %s171, 16
          %s501 = scalar_lea.vmem %s163, %s500 [#allocation2]
          %502 = vst [vmem:[%s501] sm:$0xff] %v498
          %503 = vst [vmem:[%s501 + $0x8] sm:$0xff] %v499
        $region37: #{tpu_custom_call.1} parent=31 // loop_footer
          %s175 = sadd.s32 1, %s171
        $region38: #{tpu_custom_call.1} parent=31 // loop_footer_branch
          %170 = sbr.rel target = $region34
        $region39: #{tpu_custom_call.1} parent=31 // loop_exit
          _
        %s504 = sand.u32 %s93, 1
        %s505 = scalar_lea.sflag [#allocation3], %s504
        %s506 = sand.u32 %s93, 1
        %s507 = smul.addr %s506, 256
        %s508 = scalar_lea.vmem [#allocation2], %s507
        // Predicated region
        $region40: #{tpu_custom_call.1} parent=31 // pred_check
          %p509 = pneg %p103
        $region41: #{tpu_custom_call.1} parent=31 // pred_check_branch
          %511 = sbr.rel (%p509) target = $region43
        $region42: #{tpu_custom_call.1} parent=31 // pred_region
          %513 = vsyncadd %s505, 0
          %s514 = smul.addr %s17, 32
          %s515 = smul.addr %s514, 8
          %s516 = scalar_lea.hbm %s3, %s515
          %s517 = sshll.u32 %s508, 4
          %s518 = int_to_ptr.vmem [resolvable:$true] %s517
          %s519 = sshll.u32 %s516, 4
          %s520 = int_to_ptr.hbm [resolvable:$true] %s519
          %525 = dma.vmem_to_hbm [thread:$0]  %s518, 4096, %s520, %s505, 128, 128, 8
        $region43: #{tpu_custom_call.1} parent=31 // pred_fallthru
          _
      $region32: #{tpu_custom_call.1} parent=5 // pred_fallthru
        _
      %p526 = scmp.le.s32.totalorder 2, %s12
      // Predicated region
      $region44: #{tpu_custom_call.1} parent=5 // pred_check
        %p527 = pneg %p526
      $region45: #{tpu_custom_call.1} parent=5 // pred_check_branch
        %529 = sbr.rel (%p527) target = $region47
      $region46: #{tpu_custom_call.1} parent=5 // pred_region
        %s530 = ssub.s32 %s12, 2
        // Predicated region
        $region48: #{tpu_custom_call.1} parent=46 // pred_check
          %p531 = pneg %p109
        $region49: #{tpu_custom_call.1} parent=46 // pred_check_branch
          %533 = sbr.rel (%p531) target = $region51
        $region50: #{tpu_custom_call.1} parent=46 // pred_region
          %s534 = sand.u32 %s94, 1
          %s535 = scalar_lea.sflag [#allocation3], %s534
          %s536 = sand.u32 %s94, 1
          %s537 = smul.addr %s536, 256
          %s538 = scalar_lea.vmem [#allocation2], %s537
          %540 = dma.done %s535, 4096
        $region51: #{tpu_custom_call.1} parent=46 // pred_fallthru
          _
      $region47: #{tpu_custom_call.1} parent=5 // pred_fallthru
        _
    $region6: #{tpu_custom_call.1} parent=1 // loop_footer
      %s16 = sadd.s32 1, %s12
    $region7: #{tpu_custom_call.1} parent=1 // loop_footer_branch
      %11 = sbr.rel target = $region3
    $region8: #{tpu_custom_call.1} parent=1 // loop_exit
      _
    %541 = vsyncpa [#allocation3], 1
    %s542 = scalar_lea.sflag [#allocation3], 1
    %543 = vsyncpa %s542, 1

</llo_original>
